<compile_context>
chip_gen: v7x
topology: tpu7x:2x2x1
jax: 0.10.0
libtpu: 0.0.40
codegen_flags: <defaults>
</compile_context>

<pallas_src>
import functools
import math

import jax
import jax.numpy as jnp
from jax.experimental import pallas as pl
from jax.experimental.pallas import tpu as pltpu


def _weight_average_kernel(coef_ref, *refs, n: int):
    # coef_ref: SMEM (n,) f32  -- already softmax(W) * rate
    # refs:     n VMEM input tiles (tile_m, L) + 1 VMEM output tile (tile_m, L)
    x_refs = refs[:n]
    o_ref = refs[n]

    acc = coef_ref[0] * x_refs[0][...].astype(jnp.float32)
    for i in range(1, n):
        acc = acc + coef_ref[i] * x_refs[i][...].astype(jnp.float32)
    o_ref[...] = acc.astype(o_ref.dtype)


_LANE_CANDIDATES = (2048, 1024, 512, 256, 128)


def _plan_layout(total):
    """Pick a lane-dense (rows, L) view of a flat tensor of `total` elements."""
    # Prefer a lane width that leaves at least 8 rows (full sublanes) for tiling.
    for L in _LANE_CANDIDATES:
        if total % L == 0 and total // L >= 8:
            return L, total // L, 0
    # Small tensors: any 128-multiple lane width that divides exactly
    # (smallest first to maximize sublane rows).
    for L in reversed(_LANE_CANDIDATES):
        if total % L == 0:
            return L, total // L, 0
    # Fallback: pad the flat tensor up to a multiple of 128 lanes.
    L = 128
    pad = (-total) % L
    return L, (total + pad) // L, pad


def _choose_tile_m(rows, L, n, itemsize, vmem_budget_bytes=12 * 1024 * 1024):
    """Largest row tile whose double-buffered footprint fits the VMEM budget."""
    per_row = 2 * (n + 1) * L * itemsize  # n inputs + 1 output, double-buffered
    tm = max(1, vmem_budget_bytes // per_row)
    tm = min(tm, rows, 2048)
    if rows < 8:
        return rows                 # block rows == full array rows is legal
    if tm < 8:
        return 8
    return (tm // 8) * 8            # keep sublane (8) alignment


def weight_average(inputs, W, rate):
    """Returns rate * sum(softmax(W)[i] * inputs[i]); all inputs same shape."""
    inputs = list(inputs)
    n = len(inputs)
    assert W.shape == (n,)
    orig_shape = inputs[0].shape
    dtype = inputs[0].dtype
    total = math.prod(orig_shape)

    # Fold softmax + rate into n scalars once, outside the per-tile hot path.
    coefs = jax.nn.softmax(W.astype(jnp.float32), axis=0) * jnp.reshape(
        rate.astype(jnp.float32), ()
    )

    # Lane-dense slab view of each input (contiguous reshape; no stack copy).
    L, rows, pad = _plan_layout(total)

    def to_slab(x):
        flat = x.reshape(-1)
        if pad:
            flat = jnp.pad(flat, (0, pad))
        return flat.reshape(rows, L)

    slabs = [to_slab(x) for x in inputs]

    tile_m = _choose_tile_m(rows, L, n, jnp.dtype(dtype).itemsize)
    grid = (pl.cdiv(rows, tile_m),)
    tile_spec = pl.BlockSpec((tile_m, L), lambda i: (i, 0))

    out = pl.pallas_call(
        functools.partial(_weight_average_kernel, n=n),
        out_shape=jax.ShapeDtypeStruct((rows, L), dtype),
        grid_spec=pltpu.PrefetchScalarGridSpec(
            num_scalar_prefetch=0,
            grid=grid,
            in_specs=[pl.BlockSpec(memory_space=pltpu.MemorySpace.SMEM)]  # coefs
            + [tile_spec] * n,                                            # inputs
            out_specs=tile_spec,
        ),
        compiler_params=pltpu.CompilerParams(
            dimension_semantics=("parallel",),
            vmem_limit_bytes=32 * 1024 * 1024,
        ),
    )(coefs, *slabs)

    flat = out.reshape(-1)
    if pad:
        flat = flat[:total]
    return flat.reshape(orig_shape)


def _reference(inputs, W, rate):
    Wsm = jax.nn.softmax(W.astype(jnp.float32), axis=0)
    return jnp.reshape(rate, ()) * sum(w * x for w, x in zip(Wsm, inputs))


if __name__ == "__main__":
    key = jax.random.PRNGKey(0)
    n = 4                      # number of tensors being averaged
    B, S, H = 2, 8, 32         # each input tensor: [B, S, H]

    k_x, k_w = jax.random.split(key)
    xs = list(jax.random.normal(k_x, (n, B, S, H), dtype=jnp.float32))

    # Module inits W=zeros, rate=1.0; perturb deterministically so softmax is
    # non-trivial and rate != 1.
    W = jax.random.normal(k_w, (n,), dtype=jnp.float32)
    rate = jnp.array([1.5], dtype=jnp.float32)

    out = weight_average(xs, W, rate)
    out = jax.block_until_ready(out)
    assert out.shape == (B, S, H)
    assert jnp.allclose(out, _reference(xs, W, rate), atol=1e-5, rtol=1e-5)

    # Second check: a shape whose row count is not a multiple of the chosen
    # tile (exercises the pl.cdiv grid + masked tail-block path).
    xs2 = list(jax.random.normal(jax.random.PRNGKey(1), (n, 4, 100, 200),
                                 dtype=jnp.float32))
    out2 = jax.block_until_ready(weight_average(xs2, W, rate))
    assert out2.shape == (4, 100, 200)
    assert jnp.allclose(out2, _reference(xs2, W, rate), atol=1e-5, rtol=1e-5)

    print("KERNEL_OK")
</pallas_src>

<mosaic_0001>
module attributes {stable_mosaic.version = 11 : i64} {
  func.func @_weight_average_kernel(%arg0: i32, %arg1: memref<4xf32, #tpu.memory_space<smem>>, %arg2: memref<4x128xf32, #tpu.memory_space<vmem>>, %arg3: memref<4x128xf32, #tpu.memory_space<vmem>>, %arg4: memref<4x128xf32, #tpu.memory_space<vmem>>, %arg5: memref<4x128xf32, #tpu.memory_space<vmem>>, %arg6: memref<4x128xf32, #tpu.memory_space<vmem>>) attributes {dimension_semantics = [#tpu.dimension_semantics<parallel>], iteration_bounds = array<i64: 1>, scalar_prefetch = 0 : i64, scratch_operands = 0 : i64, tpu.core_type = #tpu.core_type<tc>, window_params = [{transform_indices = @transform_0, window_bounds = array<i64: 4>}, {transform_indices = @transform_1, window_bounds = array<i64: 4, 128>}, {transform_indices = @transform_2, window_bounds = array<i64: 4, 128>}, {transform_indices = @transform_3, window_bounds = array<i64: 4, 128>}, {transform_indices = @transform_4, window_bounds = array<i64: 4, 128>}, {transform_indices = @transform_5, window_bounds = array<i64: 4, 128>}]} {
    %c0 = arith.constant 0 : index
    %0 = memref.load %arg1[%c0] : memref<4xf32, #tpu.memory_space<smem>>
    %c0_0 = arith.constant 0 : index
    %c0_1 = arith.constant 0 : index
    %1 = vector.load %arg2[%c0_0, %c0_1] : memref<4x128xf32, #tpu.memory_space<vmem>>, vector<4x128xf32>
    %2 = vector.broadcast %0 : f32 to vector<4x128xf32>
    %3 = arith.mulf %2, %1 : vector<4x128xf32>
    %c1 = arith.constant 1 : index
    %4 = memref.load %arg1[%c1] : memref<4xf32, #tpu.memory_space<smem>>
    %c0_2 = arith.constant 0 : index
    %c0_3 = arith.constant 0 : index
    %5 = vector.load %arg3[%c0_2, %c0_3] : memref<4x128xf32, #tpu.memory_space<vmem>>, vector<4x128xf32>
    %6 = vector.broadcast %4 : f32 to vector<4x128xf32>
    %7 = arith.mulf %6, %5 : vector<4x128xf32>
    %8 = arith.addf %3, %7 : vector<4x128xf32>
    %c2 = arith.constant 2 : index
    %9 = memref.load %arg1[%c2] : memref<4xf32, #tpu.memory_space<smem>>
    %c0_4 = arith.constant 0 : index
    %c0_5 = arith.constant 0 : index
    %10 = vector.load %arg4[%c0_4, %c0_5] : memref<4x128xf32, #tpu.memory_space<vmem>>, vector<4x128xf32>
    %11 = vector.broadcast %9 : f32 to vector<4x128xf32>
    %12 = arith.mulf %11, %10 : vector<4x128xf32>
    %13 = arith.addf %8, %12 : vector<4x128xf32>
    %c3 = arith.constant 3 : index
    %14 = memref.load %arg1[%c3] : memref<4xf32, #tpu.memory_space<smem>>
    %c0_6 = arith.constant 0 : index
    %c0_7 = arith.constant 0 : index
    %15 = vector.load %arg5[%c0_6, %c0_7] : memref<4x128xf32, #tpu.memory_space<vmem>>, vector<4x128xf32>
    %16 = vector.broadcast %14 : f32 to vector<4x128xf32>
    %17 = arith.mulf %16, %15 : vector<4x128xf32>
    %18 = arith.addf %13, %17 : vector<4x128xf32>
    %c0_8 = arith.constant 0 : index
    %c0_9 = arith.constant 0 : index
    %19 = vector.load %arg6[%c0_8, %c0_9] : memref<4x128xf32, #tpu.memory_space<vmem>>, vector<4x128xf32>
    tpu.vector_store %arg6[%c0_8, %c0_9], %18 {strides = array<i32>} : memref<4x128xf32, #tpu.memory_space<vmem>>, vector<4x128xf32>,
    return
  }
  func.func @transform_0(%arg0: i32) -> i32 {
    %c0_i32 = arith.constant 0 : i32
    %c0_i32_0 = arith.constant 0 : i32
    return %c0_i32 : i32
  }
  func.func @transform_1(%arg0: i32) -> (i32, i32) {
    %c0_i32 = arith.constant 0 : i32
    %c0_i32_0 = arith.constant 0 : i32
    return %arg0, %c0_i32 : i32, i32
  }
  func.func @transform_2(%arg0: i32) -> (i32, i32) {
    %c0_i32 = arith.constant 0 : i32
    %c0_i32_0 = arith.constant 0 : i32
    return %arg0, %c0_i32 : i32, i32
  }
  func.func @transform_3(%arg0: i32) -> (i32, i32) {
    %c0_i32 = arith.constant 0 : i32
    %c0_i32_0 = arith.constant 0 : i32
    return %arg0, %c0_i32 : i32, i32
  }
  func.func @transform_4(%arg0: i32) -> (i32, i32) {
    %c0_i32 = arith.constant 0 : i32
    %c0_i32_0 = arith.constant 0 : i32
    return %arg0, %c0_i32 : i32, i32
  }
  func.func @transform_5(%arg0: i32) -> (i32, i32) {
    %c0_i32 = arith.constant 0 : i32
    %c0_i32_0 = arith.constant 0 : i32
    return %arg0, %c0_i32 : i32, i32
  }
}

</mosaic_0001>

<llo_original>
// kernel: tpu_custom_call.1
$region0: #{tpu_custom_call.1}
  #allocation0 [shape = 'u32[]', space=smem, size = 0x4, offset = 0x4, fixed_abs, tag = 'smem constant byte address 0x4 - core index']
  #allocation1 [shape = 'u32[144,128]{1,0:T(1,128)}', space=vmem, size = 0x12000, scoped, tag = 'internal scratch']
  %s0 = inlined_call_operand.hbm [shape: f32[4], index: 0, kind: input, shape index: {}]
  %s1 = inlined_call_operand.hbm [shape: f32[4,128], index: 1, kind: input, shape index: {}]
  %s2 = inlined_call_operand.vmem [shape: f32[4,128], index: 2, kind: input, shape index: {}]
  %s3 = inlined_call_operand.vmem [shape: f32[4,128], index: 3, kind: input, shape index: {}]
  %s4 = inlined_call_operand.vmem [shape: f32[4,128], index: 4, kind: input, shape index: {}]
  %s5 = inlined_call_operand.hbm [shape: f32[4,128], index: 5, kind: output, shape index: {}]
  %s6 = sld [smem:[#allocation0]]
  $region38: #{tpu_custom_call.1} parent=0
    _
  %s8 = ssub.s32 1, %s6
  %s9 = scalar_select 0, %s8, %s6
  $region1: #{tpu_custom_call.1} parent=0
    #allocation2 [shape = 'u8[512]{0}', space=smem, size = 0x200, scoped, tag = 'input window, operand 0, single buffered']
    #allocation3 [shape = 's32[1]{0}', space=sflag, size = 0x4, scoped, tag = 'scoped memory for tpu_custom_call.1']
    #allocation4 [shape = 's32[1]{0}', space=sflag, size = 0x4, scoped, tag = 'scoped memory for tpu_custom_call.1']
    #allocation5 [shape = 's32[1]{0}', space=sflag, size = 0x4, scoped, tag = 'scoped memory for tpu_custom_call.1']
    #allocation6 [shape = 'u8[2048]{0}', space=vmem, size = 0x800, scoped, tag = 'input window, operand 1, single buffered']
    #allocation7 [shape = 'u8[2048]{0}', space=vmem, size = 0x800, scoped, tag = 'output window, operand 0, single buffered']
    %10 = vsyncpa [#allocation5], 0
    %11 = vsyncpa [#allocation3], 0
    %12 = vsyncpa [#allocation4], 0
    // Predicated region
    $region2: #{tpu_custom_call.1} parent=1 // pred_check
      _
    $region3: #{tpu_custom_call.1} parent=1 // pred_check_branch
      %14 = sbr.rel (0) target = $region5
    $region4: #{tpu_custom_call.1} parent=1 // pred_region
      %s16 = ssub.s32 16, 16
      %17 = vsyncadd [#allocation5], %s16
      %20 = dma.hbm_to_smem %s0, 16, [#allocation2], [#allocation5]
    $region5: #{tpu_custom_call.1} parent=1 // pred_fallthru
      _
    // Predicated region
    $region6: #{tpu_custom_call.1} parent=1 // pred_check
      _
    $region7: #{tpu_custom_call.1} parent=1 // pred_check_branch
      %22 = sbr.rel (0) target = $region9
    $region8: #{tpu_custom_call.1} parent=1 // pred_region
      %s24 = ssub.s32 64, 64
      %25 = vsyncadd [#allocation3], %s24
      %s27 = sshll.u32 [#allocation6], 4
      %s28 = int_to_ptr.vmem [resolvable:$true] %s27
      %30 = dma.hbm_to_vmem [thread:$0]  %s1, 64, %s28, [#allocation3]
    $region9: #{tpu_custom_call.1} parent=1 // pred_fallthru
      _
    // Predicated region
    $region10: #{tpu_custom_call.1} parent=1 // pred_check
      _
    $region11: #{tpu_custom_call.1} parent=1 // pred_check_branch
      %32 = sbr.rel (0) target = $region13
    $region12: #{tpu_custom_call.1} parent=1 // pred_region
      _
    $region13: #{tpu_custom_call.1} parent=1 // pred_fallthru
      _
    // Predicated region
    $region14: #{tpu_custom_call.1} parent=1 // pred_check
      _
    $region15: #{tpu_custom_call.1} parent=1 // pred_check_branch
      %34 = sbr.rel (0) target = $region17
    $region16: #{tpu_custom_call.1} parent=1 // pred_region
      _
    $region17: #{tpu_custom_call.1} parent=1 // pred_fallthru
      _
    // Predicated region
    $region18: #{tpu_custom_call.1} parent=1 // pred_check
      _
    $region19: #{tpu_custom_call.1} parent=1 // pred_check_branch
      %36 = sbr.rel (0) target = $region21
    $region20: #{tpu_custom_call.1} parent=1 // pred_region
      _
    $region21: #{tpu_custom_call.1} parent=1 // pred_fallthru
      _
    // Predicated region
    $region22: #{tpu_custom_call.1} parent=1 // pred_check
      _
    $region23: #{tpu_custom_call.1} parent=1 // pred_check_branch
      %38 = sbr.rel (0) target = $region25
    $region24: #{tpu_custom_call.1} parent=1 // pred_region
      %39 = dma.done [#allocation5], 16
    $region25: #{tpu_custom_call.1} parent=1 // pred_fallthru
      _
    // Predicated region
    $region26: #{tpu_custom_call.1} parent=1 // pred_check
      _
    $region27: #{tpu_custom_call.1} parent=1 // pred_check_branch
      %41 = sbr.rel (0) target = $region29
    $region28: #{tpu_custom_call.1} parent=1 // pred_region
      %42 = dma.done [#allocation3], 64
    $region29: #{tpu_custom_call.1} parent=1 // pred_fallthru
      _
    %43 = sfence
    %s44 = sld [smem:[#allocation2]]
    %v45 = vld [vmem:[#allocation6] sm:$0xf]
    %v46 = vstv %s44
    %v47 = vmul.f32 %v46, %v45
    %s48 = sld [smem:[#allocation2 + $0x1]]
    %v49 = vld [vmem:[%s2] sm:$0xf]
    %v50 = vstv %s48
    %v51 = vmul.f32 %v50, %v49
    %v52 = vadd.f32 %v47, %v51
    %s53 = sld [smem:[#allocation2 + $0x2]]
    %v54 = vld [vmem:[%s3] sm:$0xf]
    %v55 = vstv %s53
    %v56 = vmul.f32 %v55, %v54
    %v57 = vadd.f32 %v52, %v56
    %s58 = sld [smem:[#allocation2 + $0x3]]
    %v59 = vld [vmem:[%s4] sm:$0xf]
    %v60 = vstv %s58
    %v61 = vmul.f32 %v60, %v59
    %v62 = vadd.f32 %v57, %v61
    %63 = vst [vmem:[#allocation7] sm:$0xf] %v62
    // Predicated region
    $region30: #{tpu_custom_call.1} parent=1 // pred_check
      _
    $region31: #{tpu_custom_call.1} parent=1 // pred_check_branch
      %65 = sbr.rel (0) target = $region33
    $region32: #{tpu_custom_call.1} parent=1 // pred_region
      %s67 = ssub.s32 64, 64
      %68 = vsyncadd [#allocation4], %s67
      %s70 = sshll.u32 [#allocation7], 4
      %s71 = int_to_ptr.vmem [resolvable:$true] %s70
      %73 = dma.vmem_to_hbm [thread:$0]  %s71, 64, %s5, [#allocation4]
    $region33: #{tpu_custom_call.1} parent=1 // pred_fallthru
      _
    // Predicated region
    $region34: #{tpu_custom_call.1} parent=1 // pred_check
      _
    $region35: #{tpu_custom_call.1} parent=1 // pred_check_branch
      %75 = sbr.rel (0) target = $region37
    $region36: #{tpu_custom_call.1} parent=1 // pred_region
      %76 = dma.done [#allocation4], 64
    $region37: #{tpu_custom_call.1} parent=1 // pred_fallthru
      _
    %77 = vsyncpa [#allocation3], 1
    %78 = vsyncpa [#allocation4], 1
    %79 = vsyncpa [#allocation5], 1

</llo_original>
